<compile_context>
chip_gen: v7x
topology: tpu7x:2x2x1
jax: 0.10.0
libtpu: 0.0.40
codegen_flags: <defaults>
</compile_context>

<pallas_src>
import functools

import jax
import jax.numpy as jnp
from jax.experimental import pallas as pl
from jax.experimental.pallas import tpu as pltpu

LANES = 128
SUBLANES = 8


def _irt_kernel(theta_ref, a_ref, b_ref, c_ref, o_ref, *, value_range, a_range, D):
    # All refs: (r_blk, 128) f32 tiles.
    theta = theta_ref[...]
    a = a_ref[...]
    b = b_ref[...]
    c = jax.nn.sigmoid(c_ref[...])

    if value_range > 0:
        # value_range * (sigmoid(x) - 0.5) == 0.5 * value_range * tanh(0.5 * x)
        half_range = 0.5 * value_range
        theta = half_range * jnp.tanh(0.5 * theta)
        b = half_range * jnp.tanh(0.5 * b)
    if a_range > 0:
        a = a_range * jax.nn.sigmoid(a)
    else:
        a = jax.nn.softplus(a)

    # sigmoid(z) instead of 1/(1+exp(-z)): single EUP push, no divide, no inf.
    out = c + (1.0 - c) * jax.nn.sigmoid(D * a * (theta - b))
    o_ref[...] = out.astype(o_ref.dtype)


def _round_up(x, m):
    return (x + m - 1) // m * m


@functools.partial(
    jax.jit,
    static_argnames=("value_range", "a_range", "D", "block_rows", "out_dtype"),
)
def irt_forward(theta_table, a_table, b_table, c_table, user_id, question_id, *,
                value_range, a_range, D, block_rows=2048, out_dtype=jnp.float32):
    """IRT forward.  Tables are (N, 1) embeddings, ids are (B,) int32.

    Returns (B,) predictions in `out_dtype` (default f32).  Padded tail lanes
    (when B is not a tile multiple) are computed on zeros and sliced off.
    """
    B = user_id.shape[0]

    # Embedding gather (squeeze(-1)) — stays in XLA, fuses with the pad/reshape
    # below because everything is inside this one jit.
    theta = theta_table[user_id, 0]
    a = a_table[question_id, 0]
    b = b_table[question_id, 0]
    c = c_table[question_id, 0]

    # Lane-dense (rows, 128) tiling, (8,128)-aligned.
    rows_min = max(_round_up(pl.cdiv(B, LANES), SUBLANES), SUBLANES)
    r_blk = _round_up(min(block_rows, rows_min), SUBLANES)
    if rows_min >= 2 * SUBLANES:
        # Guarantee >= 2 grid steps so the "parallel" axis splits across both
        # v7x TensorCores (no-op on single-TC v5e/v6e).
        r_blk = min(r_blk, _round_up(rows_min // 2, SUBLANES))
    rows = _round_up(rows_min, r_blk)
    b_pad = rows * LANES

    def to_tiles(v):
        return jnp.pad(v, (0, b_pad - B)).reshape(rows, LANES)

    theta, a, b, c = (to_tiles(v) for v in (theta, a, b, c))

    kernel = functools.partial(
        _irt_kernel, value_range=value_range, a_range=a_range, D=D
    )

    spec = pl.BlockSpec((r_blk, LANES), lambda i: (i, 0))
    out = pl.pallas_call(
        kernel,
        out_shape=jax.ShapeDtypeStruct((rows, LANES), out_dtype),
        grid_spec=pltpu.PrefetchScalarGridSpec(
            num_scalar_prefetch=0,
            grid=(rows // r_blk,),
            in_specs=[spec, spec, spec, spec],
            out_specs=spec,
        ),
        compiler_params=pltpu.CompilerParams(
            dimension_semantics=("parallel",),
        ),
    )(theta, a, b, c)

    return out.reshape(b_pad)[:B]


if __name__ == "__main__":
    # Model config (what self.params['models_config']['IRT'] would carry).
    NUM_USERS = 64
    NUM_QUESTIONS = 128
    VALUE_RANGE = 8.0
    A_RANGE = 4.0
    D_CONST = 1.702

    key = jax.random.PRNGKey(0)
    k_theta, k_a, k_b, k_c, k_uid, k_qid = jax.random.split(key, 6)

    # Deterministic "embedding tables": (num, 1) each, as in the EmbedLayer.
    theta_table = jax.random.normal(k_theta, (NUM_USERS, 1), jnp.float32)
    a_table = jax.random.normal(k_a, (NUM_QUESTIONS, 1), jnp.float32)
    b_table = jax.random.normal(k_b, (NUM_QUESTIONS, 1), jnp.float32)
    c_table = jax.random.normal(k_c, (NUM_QUESTIONS, 1), jnp.float32)

    # Batch of interaction ids.  Deliberately NOT a multiple of 128: exercises
    # the pad-and-slice path, and yields a 2-step grid (both-TC path on v7x).
    BATCH = 2000
    user_id = jax.random.randint(k_uid, (BATCH,), 0, NUM_USERS)
    question_id = jax.random.randint(k_qid, (BATCH,), 0, NUM_QUESTIONS)

    predict_score = irt_forward(
        theta_table, a_table, b_table, c_table, user_id, question_id,
        value_range=VALUE_RANGE, a_range=A_RANGE, D=D_CONST,
    )
    jax.block_until_ready(predict_score)

    # Pure-JAX reference with the original torch formulas, f32 throughout.
    def ref():
        theta = theta_table[user_id, 0]
        a = a_table[question_id, 0]
        b = b_table[question_id, 0]
        c = jax.nn.sigmoid(c_table[question_id, 0])
        theta = VALUE_RANGE * (jax.nn.sigmoid(theta) - 0.5)
        b = VALUE_RANGE * (jax.nn.sigmoid(b) - 0.5)
        a = A_RANGE * jax.nn.sigmoid(a)
        return c + (1.0 - c) / (1.0 + jnp.exp(-D_CONST * a * (theta - b)))

    expected = ref()

    assert predict_score.shape == (BATCH,)
    assert predict_score.dtype == jnp.float32
    max_err = float(jnp.max(jnp.abs(predict_score - expected)))
    assert jnp.allclose(predict_score, expected, atol=1e-5, rtol=1e-5), max_err

    print("KERNEL_OK")
</pallas_src>

<mosaic_0001>
module attributes {stable_mosaic.version = 11 : i64} {
  func.func @_irt_kernel(%arg0: i32, %arg1: memref<8x128xf32, #tpu.memory_space<vmem>>, %arg2: memref<8x128xf32, #tpu.memory_space<vmem>>, %arg3: memref<8x128xf32, #tpu.memory_space<vmem>>, %arg4: memref<8x128xf32, #tpu.memory_space<vmem>>, %arg5: memref<8x128xf32, #tpu.memory_space<vmem>>) attributes {dimension_semantics = [#tpu.dimension_semantics<parallel>], iteration_bounds = array<i64: 2>, scalar_prefetch = 0 : i64, scratch_operands = 0 : i64, tpu.core_type = #tpu.core_type<tc>, window_params = [{transform_indices = @transform_0, window_bounds = array<i64: 8, 128>}, {transform_indices = @transform_1, window_bounds = array<i64: 8, 128>}, {transform_indices = @transform_2, window_bounds = array<i64: 8, 128>}, {transform_indices = @transform_3, window_bounds = array<i64: 8, 128>}, {transform_indices = @transform_4, window_bounds = array<i64: 8, 128>}]} {
    %c0 = arith.constant 0 : index
    %c0_0 = arith.constant 0 : index
    %0 = vector.load %arg1[%c0, %c0_0] : memref<8x128xf32, #tpu.memory_space<vmem>>, vector<8x128xf32>
    %c0_1 = arith.constant 0 : index
    %c0_2 = arith.constant 0 : index
    %1 = vector.load %arg2[%c0_1, %c0_2] : memref<8x128xf32, #tpu.memory_space<vmem>>, vector<8x128xf32>
    %c0_3 = arith.constant 0 : index
    %c0_4 = arith.constant 0 : index
    %2 = vector.load %arg3[%c0_3, %c0_4] : memref<8x128xf32, #tpu.memory_space<vmem>>, vector<8x128xf32>
    %c0_5 = arith.constant 0 : index
    %c0_6 = arith.constant 0 : index
    %3 = vector.load %arg4[%c0_5, %c0_6] : memref<8x128xf32, #tpu.memory_space<vmem>>, vector<8x128xf32>
    %4 = arith.negf %3 : vector<8x128xf32>
    %5 = math.exp %4 : vector<8x128xf32>
    %cst = arith.constant 1.000000e+00 : f32
    %6 = vector.broadcast %cst : f32 to vector<8x128xf32>
    %7 = arith.addf %6, %5 : vector<8x128xf32>
    %8 = arith.divf %6, %7 : vector<8x128xf32>
    %cst_7 = arith.constant 5.000000e-01 : f32
    %9 = vector.broadcast %cst_7 : f32 to vector<8x128xf32>
    %10 = arith.mulf %9, %0 : vector<8x128xf32>
    %11 = math.tanh %10 : vector<8x128xf32>
    %cst_8 = arith.constant 4.000000e+00 : f32
    %12 = vector.broadcast %cst_8 : f32 to vector<8x128xf32>
    %13 = arith.mulf %12, %11 : vector<8x128xf32>
    %cst_9 = arith.constant 5.000000e-01 : f32
    %14 = vector.broadcast %cst_9 : f32 to vector<8x128xf32>
    %15 = arith.mulf %14, %2 : vector<8x128xf32>
    %16 = math.tanh %15 : vector<8x128xf32>
    %cst_10 = arith.constant 4.000000e+00 : f32
    %17 = vector.broadcast %cst_10 : f32 to vector<8x128xf32>
    %18 = arith.mulf %17, %16 : vector<8x128xf32>
    %19 = arith.negf %1 : vector<8x128xf32>
    %20 = math.exp %19 : vector<8x128xf32>
    %cst_11 = arith.constant 1.000000e+00 : f32
    %21 = vector.broadcast %cst_11 : f32 to vector<8x128xf32>
    %22 = arith.addf %21, %20 : vector<8x128xf32>
    %23 = arith.divf %21, %22 : vector<8x128xf32>
    %cst_12 = arith.constant 4.000000e+00 : f32
    %24 = vector.broadcast %cst_12 : f32 to vector<8x128xf32>
    %25 = arith.mulf %24, %23 : vector<8x128xf32>
    %cst_13 = arith.constant 1.000000e+00 : f32
    %26 = vector.broadcast %cst_13 : f32 to vector<8x128xf32>
    %27 = arith.subf %26, %8 : vector<8x128xf32>
    %cst_14 = arith.constant 1.702000e+00 : f32
    %28 = vector.broadcast %cst_14 : f32 to vector<8x128xf32>
    %29 = arith.mulf %28, %25 : vector<8x128xf32>
    %30 = arith.subf %13, %18 : vector<8x128xf32>
    %31 = arith.mulf %29, %30 : vector<8x128xf32>
    %32 = arith.negf %31 : vector<8x128xf32>
    %33 = math.exp %32 : vector<8x128xf32>
    %cst_15 = arith.constant 1.000000e+00 : f32
    %34 = vector.broadcast %cst_15 : f32 to vector<8x128xf32>
    %35 = arith.addf %34, %33 : vector<8x128xf32>
    %36 = arith.divf %34, %35 : vector<8x128xf32>
    %37 = arith.mulf %27, %36 : vector<8x128xf32>
    %38 = arith.addf %8, %37 : vector<8x128xf32>
    %c0_16 = arith.constant 0 : index
    %c0_17 = arith.constant 0 : index
    %39 = vector.load %arg5[%c0_16, %c0_17] : memref<8x128xf32, #tpu.memory_space<vmem>>, vector<8x128xf32>
    tpu.vector_store %arg5[%c0_16, %c0_17], %38 {strides = array<i32>} : memref<8x128xf32, #tpu.memory_space<vmem>>, vector<8x128xf32>,
    return
  }
  func.func @transform_0(%arg0: i32) -> (i32, i32) {
    %c0_i32 = arith.constant 0 : i32
    %c0_i32_0 = arith.constant 0 : i32
    return %arg0, %c0_i32 : i32, i32
  }
  func.func @transform_1(%arg0: i32) -> (i32, i32) {
    %c0_i32 = arith.constant 0 : i32
    %c0_i32_0 = arith.constant 0 : i32
    return %arg0, %c0_i32 : i32, i32
  }
  func.func @transform_2(%arg0: i32) -> (i32, i32) {
    %c0_i32 = arith.constant 0 : i32
    %c0_i32_0 = arith.constant 0 : i32
    return %arg0, %c0_i32 : i32, i32
  }
  func.func @transform_3(%arg0: i32) -> (i32, i32) {
    %c0_i32 = arith.constant 0 : i32
    %c0_i32_0 = arith.constant 0 : i32
    return %arg0, %c0_i32 : i32, i32
  }
  func.func @transform_4(%arg0: i32) -> (i32, i32) {
    %c0_i32 = arith.constant 0 : i32
    %c0_i32_0 = arith.constant 0 : i32
    return %arg0, %c0_i32 : i32, i32
  }
}

</mosaic_0001>

<llo_original>
// kernel: irt_forward.1
$region0: #{irt_forward.1}
  #allocation0 [shape = 'u32[]', space=smem, size = 0x4, offset = 0x4, fixed_abs, tag = 'smem constant byte address 0x4 - core index']
  #allocation1 [shape = 'u32[144,128]{1,0:T(1,128)}', space=vmem, size = 0x12000, scoped, tag = 'internal scratch']
  %s0 = inlined_call_operand.vmem [shape: f32[16,128], index: 0, kind: input, shape index: {}]
  %s1 = inlined_call_operand.vmem [shape: f32[16,128], index: 1, kind: input, shape index: {}]
  %s2 = inlined_call_operand.vmem [shape: f32[16,128], index: 2, kind: input, shape index: {}]
  %s3 = inlined_call_operand.vmem [shape: f32[16,128], index: 3, kind: input, shape index: {}]
  %s4 = inlined_call_operand.hbm [shape: f32[16,128], index: 4, kind: output, shape index: {}]
  %s5 = sld [smem:[#allocation0]]
  $region49: #{irt_forward.1} parent=0
    _
  %s7 = ssub.s32 1, %s5
  %s8 = scalar_select 0, %s7, %s5
  $region1: #{irt_forward.1} parent=0
    #allocation2 [shape = 'u8[8192]{0}', space=vmem, size = 0x2000, scoped, tag = 'output window, operand 0']
    #allocation3 [shape = 's32[2]{0}', space=sflag, size = 0x8, scoped, tag = 'scoped memory for irt_forward.1']
    %9 = vsyncpa [#allocation3], 0
    %s10 = scalar_lea.sflag [#allocation3], 1
    %11 = vsyncpa %s10, 0
    loop: start=0, step=1, limit=4
    $region2: #{irt_forward.1} parent=1 // loop_pre_header
      _
    $region3: #{irt_forward.1} parent=1 // loop_header
      %s13 = sphi 0, %s17
      %p14 = scmp.ge.s32.totalorder %s13, 4
      %s23 = sphi 0, %s25
      %s26 = sphi 0, %s23
      %s27 = sphi 0, %s26
      %s43 = sphi 0, %s27
      %s49 = sphi 0, %s51
      %s52 = sphi 0, %s49
      %s53 = sphi 0, %s52
      %s69 = sphi 0, %s53
      %s75 = sphi 0, %s77
      %s78 = sphi 0, %s75
      %s79 = sphi 0, %s78
      %s95 = sphi 0, %s79
      %s101 = sphi 0, %s103
      %s104 = sphi 0, %s101
      %s105 = sphi 0, %s104
      %s121 = sphi 0, %s105
      %s127 = sphi 0, %s129
      %s130 = sphi 0, %s127
      %s131 = sphi 0, %s130
      %s147 = sphi 0, %s131
    $region4: #{irt_forward.1} parent=1 // loop_header_branch
      %16 = sbr.rel (%p14) target = $region8
    $region5: #{irt_forward.1} parent=1 // loop_body
      %s18 = ssub.s32 %s13, 1
      %s19 = ssub.s32 %s13, 2
      %s20 = sadd.s32 %s13, 1
      %s21 = ssub.s32 %s13, %s20
      %p22 = scmp.eq.s32.totalorder %s21, 0
      %s24 = sadd.s32 %s23, 1
      %s25 = scalar_select %p22, %s23, %s24
      %p28 = pneg %p22
      %p29 = scmp.eq.s32.totalorder %s13, 1
      %p30 = por %p28, %p29
      %p31 = scmp.ne.s32.totalorder %s23, %s26
      %p32 = scmp.eq.s32.totalorder %s13, 0
      %p33 = por %p31, %p32
      %p34 = scmp.ne.s32.totalorder %s23, %s26
      %p35 = scmp.eq.s32.totalorder %s18, 1
      %p36 = por %p34, %p35
      %p37 = scmp.ne.s32.totalorder %s26, %s27
      %p38 = scmp.eq.s32.totalorder %s18, 0
      %p39 = por %p37, %p38
      %p40 = scmp.ne.s32.totalorder %s26, %s27
      %p41 = scmp.eq.s32.totalorder %s19, 1
      %p42 = por %p40, %p41
      %p44 = scmp.ne.s32.totalorder %s27, %s43
      %p45 = scmp.eq.s32.totalorder %s19, 0
      %p46 = por %p44, %p45
      %s47 = ssub.s32 %s13, %s20
      %p48 = scmp.eq.s32.totalorder %s47, 0
      %s50 = sadd.s32 %s49, 1
      %s51 = scalar_select %p48, %s49, %s50
      %p54 = pneg %p48
      %p55 = scmp.eq.s32.totalorder %s13, 1
      %p56 = por %p54, %p55
      %p57 = scmp.ne.s32.totalorder %s49, %s52
      %p58 = scmp.eq.s32.totalorder %s13, 0
      %p59 = por %p57, %p58
      %p60 = scmp.ne.s32.totalorder %s49, %s52
      %p61 = scmp.eq.s32.totalorder %s18, 1
      %p62 = por %p60, %p61
      %p63 = scmp.ne.s32.totalorder %s52, %s53
      %p64 = scmp.eq.s32.totalorder %s18, 0
      %p65 = por %p63, %p64
      %p66 = scmp.ne.s32.totalorder %s52, %s53
      %p67 = scmp.eq.s32.totalorder %s19, 1
      %p68 = por %p66, %p67
      %p70 = scmp.ne.s32.totalorder %s53, %s69
      %p71 = scmp.eq.s32.totalorder %s19, 0
      %p72 = por %p70, %p71
      %s73 = ssub.s32 %s13, %s20
      %p74 = scmp.eq.s32.totalorder %s73, 0
      %s76 = sadd.s32 %s75, 1
      %s77 = scalar_select %p74, %s75, %s76
      %p80 = pneg %p74
      %p81 = scmp.eq.s32.totalorder %s13, 1
      %p82 = por %p80, %p81
      %p83 = scmp.ne.s32.totalorder %s75, %s78
      %p84 = scmp.eq.s32.totalorder %s13, 0
      %p85 = por %p83, %p84
      %p86 = scmp.ne.s32.totalorder %s75, %s78
      %p87 = scmp.eq.s32.totalorder %s18, 1
      %p88 = por %p86, %p87
      %p89 = scmp.ne.s32.totalorder %s78, %s79
      %p90 = scmp.eq.s32.totalorder %s18, 0
      %p91 = por %p89, %p90
      %p92 = scmp.ne.s32.totalorder %s78, %s79
      %p93 = scmp.eq.s32.totalorder %s19, 1
      %p94 = por %p92, %p93
      %p96 = scmp.ne.s32.totalorder %s79, %s95
      %p97 = scmp.eq.s32.totalorder %s19, 0
      %p98 = por %p96, %p97
      %s99 = ssub.s32 %s13, %s20
      %p100 = scmp.eq.s32.totalorder %s99, 0
      %s102 = sadd.s32 %s101, 1
      %s103 = scalar_select %p100, %s101, %s102
      %p106 = pneg %p100
      %p107 = scmp.eq.s32.totalorder %s13, 1
      %p108 = por %p106, %p107
      %p109 = scmp.ne.s32.totalorder %s101, %s104
      %p110 = scmp.eq.s32.totalorder %s13, 0
      %p111 = por %p109, %p110
      %p112 = scmp.ne.s32.totalorder %s101, %s104
      %p113 = scmp.eq.s32.totalorder %s18, 1
      %p114 = por %p112, %p113
      %p115 = scmp.ne.s32.totalorder %s104, %s105
      %p116 = scmp.eq.s32.totalorder %s18, 0
      %p117 = por %p115, %p116
      %p118 = scmp.ne.s32.totalorder %s104, %s105
      %p119 = scmp.eq.s32.totalorder %s19, 1
      %p120 = por %p118, %p119
      %p122 = scmp.ne.s32.totalorder %s105, %s121
      %p123 = scmp.eq.s32.totalorder %s19, 0
      %p124 = por %p122, %p123
      %s125 = ssub.s32 %s13, %s20
      %p126 = scmp.eq.s32.totalorder %s125, 0
      %s128 = sadd.s32 %s127, 1
      %s129 = scalar_select %p126, %s127, %s128
      %p132 = pneg %p126
      %p133 = scmp.eq.s32.totalorder %s13, 1
      %p134 = por %p132, %p133
      %p135 = scmp.ne.s32.totalorder %s127, %s130
      %p136 = scmp.eq.s32.totalorder %s13, 0
      %p137 = por %p135, %p136
      %p138 = scmp.ne.s32.totalorder %s127, %s130
      %p139 = scmp.eq.s32.totalorder %s18, 1
      %p140 = por %p138, %p139
      %p141 = scmp.ne.s32.totalorder %s130, %s131
      %p142 = scmp.eq.s32.totalorder %s18, 0
      %p143 = por %p141, %p142
      %p144 = scmp.ne.s32.totalorder %s130, %s131
      %p145 = scmp.eq.s32.totalorder %s19, 1
      %p146 = por %p144, %p145
      %p148 = scmp.ne.s32.totalorder %s131, %s147
      %p149 = scmp.eq.s32.totalorder %s19, 0
      %p150 = por %p148, %p149
      %p151 = scmp.le.s32.totalorder 1, %s13
      %p152 = scmp.lt.s32.totalorder %s13, 3
      %p153 = pnand %p151, %p152
      %p154 = pneg %p153
      // Predicated region
      $region9: #{irt_forward.1} parent=5 // pred_check
        _
      $region10: #{irt_forward.1} parent=5 // pred_check_branch
        %156 = sbr.rel (%p153) target = $region12
      $region11: #{irt_forward.1} parent=5 // pred_region
        %s157 = ssub.s32 %s13, 1
      $region12: #{irt_forward.1} parent=5 // pred_fallthru
        _
      %p158 = scmp.lt.s32.totalorder %s13, 2
      // Predicated region
      $region13: #{irt_forward.1} parent=5 // pred_check
        %p159 = pneg %p158
      $region14: #{irt_forward.1} parent=5 // pred_check_branch
        %161 = sbr.rel (%p159) target = $region16
      $region15: #{irt_forward.1} parent=5 // pred_region
        // Predicated region
        $region17: #{irt_forward.1} parent=15 // pred_check
          %p162 = pneg %p33
        $region18: #{irt_forward.1} parent=15 // pred_check_branch
          %164 = sbr.rel (%p162) target = $region20
        $region19: #{irt_forward.1} parent=15 // pred_region
          %p165 = scmp.lt.s32.totalorder %s13, 1
          %s166 = scalar_select %p165, %s13, 1
          %s167 = smul.addr %s166, 8
          %s168 = scalar_lea.vmem %s0, %s167
        $region20: #{irt_forward.1} parent=15 // pred_fallthru
          _
        // Predicated region
        $region21: #{irt_forward.1} parent=15 // pred_check
          %p169 = pneg %p59
        $region22: #{irt_forward.1} parent=15 // pred_check_branch
          %171 = sbr.rel (%p169) target = $region24
        $region23: #{irt_forward.1} parent=15 // pred_region
          %p172 = scmp.lt.s32.totalorder %s13, 1
          %s173 = scalar_select %p172, %s13, 1
          %s174 = smul.addr %s173, 8
          %s175 = scalar_lea.vmem %s1, %s174
        $region24: #{irt_forward.1} parent=15 // pred_fallthru
          _
        // Predicated region
        $region25: #{irt_forward.1} parent=15 // pred_check
          %p176 = pneg %p85
        $region26: #{irt_forward.1} parent=15 // pred_check_branch
          %178 = sbr.rel (%p176) target = $region28
        $region27: #{irt_forward.1} parent=15 // pred_region
          %p179 = scmp.lt.s32.totalorder %s13, 1
          %s180 = scalar_select %p179, %s13, 1
          %s181 = smul.addr %s180, 8
          %s182 = scalar_lea.vmem %s2, %s181
        $region28: #{irt_forward.1} parent=15 // pred_fallthru
          _
        // Predicated region
        $region29: #{irt_forward.1} parent=15 // pred_check
          %p183 = pneg %p111
        $region30: #{irt_forward.1} parent=15 // pred_check_branch
          %185 = sbr.rel (%p183) target = $region32
        $region31: #{irt_forward.1} parent=15 // pred_region
          %p186 = scmp.lt.s32.totalorder %s13, 1
          %s187 = scalar_select %p186, %s13, 1
          %s188 = smul.addr %s187, 8
          %s189 = scalar_lea.vmem %s3, %s188
        $region32: #{irt_forward.1} parent=15 // pred_fallthru
          _
      $region16: #{irt_forward.1} parent=5 // pred_fallthru
        _
      %p190 = scmp.le.s32.totalorder 1, %s13
      %p191 = scmp.lt.s32.totalorder %s13, 3
      %p192 = pnand %p190, %p191
      %p193 = pneg %p192
      // Predicated region
      $region33: #{irt_forward.1} parent=5 // pred_check
        _
      $region34: #{irt_forward.1} parent=5 // pred_check_branch
        %195 = sbr.rel (%p192) target = $region36
      $region35: #{irt_forward.1} parent=5 // pred_region
        %s196 = ssub.s32 %s13, 1
        %p197 = scmp.lt.s32.totalorder %s18, 1
        %s198 = scalar_select %p197, %s18, 1
        %s199 = smul.addr %s198, 8
        %s200 = scalar_lea.vmem %s0, %s199
        %p201 = pneg %p39
        %p202 = pneg %p36
        %p203 = scmp.lt.s32.totalorder %s18, 1
        %s204 = scalar_select %p203, %s18, 1
        %s205 = smul.addr %s204, 8
        %s206 = scalar_lea.vmem %s1, %s205
        %p207 = pneg %p65
        %p208 = pneg %p62
        %p209 = scmp.lt.s32.totalorder %s18, 1
        %s210 = scalar_select %p209, %s18, 1
        %s211 = smul.addr %s210, 8
        %s212 = scalar_lea.vmem %s2, %s211
        %p213 = pneg %p91
        %p214 = pneg %p88
        %p215 = scmp.lt.s32.totalorder %s18, 1
        %s216 = scalar_select %p215, %s18, 1
        %s217 = smul.addr %s216, 8
        %s218 = scalar_lea.vmem %s3, %s217
        %p219 = pneg %p117
        %p220 = pneg %p114
        %p221 = pneg %p143
        %p222 = pneg %p140
        %s223 = sand.u32 %s130, 1
        %s224 = scalar_lea.sflag [#allocation3], %s223
        %s225 = sand.u32 %s130, 1
        %s226 = smul.addr %s225, 8
        %s227 = scalar_lea.vmem [#allocation2], %s226
        %p228 = scmp.lt.s32.totalorder %s18, 1
        %s229 = scalar_select %p228, %s18, 1
        %s230 = smul.addr %s229, 8
        %s231 = scalar_lea.vmem %s0, %s230
        %p232 = scmp.lt.s32.totalorder %s18, 1
        %s233 = scalar_select %p232, %s18, 1
        %s234 = smul.addr %s233, 8
        %s235 = scalar_lea.vmem %s1, %s234
        %p236 = scmp.lt.s32.totalorder %s18, 1
        %s237 = scalar_select %p236, %s18, 1
        %s238 = smul.addr %s237, 8
        %s239 = scalar_lea.vmem %s2, %s238
        %p240 = scmp.lt.s32.totalorder %s18, 1
        %s241 = scalar_select %p240, %s18, 1
        %s242 = smul.addr %s241, 8
        %s243 = scalar_lea.vmem %s3, %s242
        %v244 = vld [vmem:[%s231] sm:$0xff]
        %v245 = vld [vmem:[%s235] sm:$0xff]
        %v246 = vld [vmem:[%s239] sm:$0xff]
        %v247 = vld [vmem:[%s243] sm:$0xff]
        %v248 = vxor.u32 %v247, 2147483648
        %v249 = vmul.f32 %v248, 1.442695
        %v250 = vpow.pop %v249
        %v251 = vadd.f32 %v250, 1.0
        %v252 = vrcp.pop %v251
        %v253 = vmul.f32 1.0, %v252
        %v254 = vmul.f32 %v244, 0.5
        %v255 = vtanh.pop %v254
        %v256 = vmul.f32 %v255, 4.0
        %v257 = vmul.f32 %v246, 0.5
        %v258 = vtanh.pop %v257
        %v259 = vmul.f32 %v258, 4.0
        %v260 = vxor.u32 %v245, 2147483648
        %v261 = vmul.f32 %v260, 1.442695
        %v262 = vpow.pop %v261
        %v263 = vadd.f32 %v262, 1.0
        %v264 = vrcp.pop %v263
        %v265 = vmul.f32 1.0, %v264
        %v266 = vmul.f32 %v265, 4.0
        %v267 = vsub.f32 1.0, %v253
        %v268 = vmul.f32 %v266, 1.702
        %v269 = vsub.f32 %v256, %v259
        %v270 = vmul.f32 %v268, %v269
        %v271 = vxor.u32 %v270, 2147483648
        %v272 = vmul.f32 %v271, 1.442695
        %v273 = vpow.pop %v272
        %v274 = vadd.f32 %v273, 1.0
        %v275 = vrcp.pop %v274
        %v276 = vmul.f32 1.0, %v275
        %v277 = vmul.f32 %v267, %v276
        %v278 = vadd.f32 %v253, %v277
        %279 = vst [vmem:[%s227] sm:$0xff] %v278
        %s280 = sand.u32 %s130, 1
        %s281 = scalar_lea.sflag [#allocation3], %s280
        %s282 = sand.u32 %s130, 1
        %s283 = smul.addr %s282, 8
        %s284 = scalar_lea.vmem [#allocation2], %s283
        // Predicated region
        $region37: #{irt_forward.1} parent=35 // pred_check
          %p285 = pneg %p140
        $region38: #{irt_forward.1} parent=35 // pred_check_branch
          %287 = sbr.rel (%p285) target = $region40
        $region39: #{irt_forward.1} parent=35 // pred_region
          %s289 = ssub.s32 128, 128
          %290 = vsyncadd %s281, %s289
          %s291 = smul.addr %s18, 128
          %s292 = scalar_lea.hbm %s4, %s291
          %s294 = sshll.u32 %s284, 4
          %s295 = int_to_ptr.vmem [resolvable:$true] %s294
          %297 = dma.vmem_to_hbm [thread:$0]  %s295, 128, %s292, %s281
        $region40: #{irt_forward.1} parent=35 // pred_fallthru
          _
      $region36: #{irt_forward.1} parent=5 // pred_fallthru
        _
      %p298 = scmp.le.s32.totalorder 2, %s13
      // Predicated region
      $region41: #{irt_forward.1} parent=5 // pred_check
        %p299 = pneg %p298
      $region42: #{irt_forward.1} parent=5 // pred_check_branch
        %301 = sbr.rel (%p299) target = $region44
      $region43: #{irt_forward.1} parent=5 // pred_region
        %s302 = ssub.s32 %s13, 2
        // Predicated region
        $region45: #{irt_forward.1} parent=43 // pred_check
          %p303 = pneg %p146
        $region46: #{irt_forward.1} parent=43 // pred_check_branch
          %305 = sbr.rel (%p303) target = $region48
        $region47: #{irt_forward.1} parent=43 // pred_region
          %s306 = sand.u32 %s131, 1
          %s307 = scalar_lea.sflag [#allocation3], %s306
          %s308 = sand.u32 %s131, 1
          %s309 = smul.addr %s308, 8
          %s310 = scalar_lea.vmem [#allocation2], %s309
          %311 = dma.done %s307, 128
        $region48: #{irt_forward.1} parent=43 // pred_fallthru
          _
      $region44: #{irt_forward.1} parent=5 // pred_fallthru
        _
    $region6: #{irt_forward.1} parent=1 // loop_footer
      %s17 = sadd.s32 1, %s13
    $region7: #{irt_forward.1} parent=1 // loop_footer_branch
      %12 = sbr.rel target = $region3
    $region8: #{irt_forward.1} parent=1 // loop_exit
      _
    %312 = vsyncpa [#allocation3], 1
    %s313 = scalar_lea.sflag [#allocation3], 1
    %314 = vsyncpa %s313, 1

</llo_original>
